<compile_context>
chip_gen: v7x
topology: tpu7x:2x2x1
jax: 0.10.0
libtpu: 0.0.40
codegen_flags: <defaults>
</compile_context>

<pallas_src>
import functools

import jax
import jax.numpy as jnp
from jax import lax
from jax.experimental import pallas as pl
from jax.experimental.pallas import tpu as pltpu


def _fused_conv_bn_relu_kernel(patch_ref, w_ref, gamma_ref, beta_ref, o_ref,
                               *, n, ohw, eps):
    """Fused conv (im2col matmul) + BN (training-mode batch stats) + ReLU.

    patch_ref: (KKC, N*OHW)   im2col patches, lane-dense, matmul dtype
    w_ref:     (Cout, KKC)    flattened conv weights, matmul dtype
    gamma_ref: (Cout, 1)      BN scale, f32
    beta_ref:  (Cout, 1)      BN shift, f32
    o_ref:     (N, Cout, OHW) output (NCHW with HW flattened on lanes), f32
    """
    # One MXU matmul for the whole batch: contraction depth KKC, N*OHW lanes.
    conv = lax.dot_general(
        w_ref[...], patch_ref[...],
        dimension_numbers=(((1,), (0,)), ((), ())),
        preferred_element_type=jnp.float32)                    # (Cout, N*OHW)

    # BN batch statistics over (N, H, W) == over all columns; computed once.
    inv_count = 1.0 / float(n * ohw)
    mean = jnp.sum(conv, axis=1, keepdims=True) * inv_count    # (Cout, 1)
    ex2 = jnp.sum(conv * conv, axis=1, keepdims=True) * inv_count
    # Biased variance (PyTorch BN training-mode normalization).  One-pass
    # E[x^2]-E[x]^2 in f32; clamped for safety.  TODO(synk): switch to a
    # shifted / two-pass accumulation if N*OH*OW grows large.
    var = jnp.maximum(ex2 - mean * mean, 0.0)
    inv_std = lax.rsqrt(var + eps)                             # (Cout, 1)
    scale = gamma_ref[...] * inv_std                           # (Cout, 1)
    shift = beta_ref[...] - mean * scale                       # (Cout, 1)

    y = jnp.maximum(conv * scale + shift, 0.0)                 # (Cout, N*OHW)

    # Per-batch slabs at 128-lane-aligned column offsets: unmasked full stores.
    for b in range(n):
        o_ref[b, :, :] = y[:, b * ohw:(b + 1) * ohw].astype(o_ref.dtype)


def cnn_block_forward(x_nchw, w_oihw, bias, gamma, beta, *, padding,
                      eps=1e-5, matmul_dtype=jnp.bfloat16):
    """x_nchw: (N, Cin, H, W) f32; w_oihw: (Cout, Cin, KH, KW) f32."""
    n, cin, h, w = x_nchw.shape
    cout, _, kh, kw = w_oihw.shape
    hp, wp = h + 2 * padding, w + 2 * padding
    out_h = hp - kh + 1
    out_w = wp - kw + 1
    ohw = out_h * out_w
    kkc = kh * kw * cin

    # Conv bias is a per-channel constant that the training-mode BN mean
    # subtraction cancels exactly -> drop it (output unchanged).
    del bias

    # Input prep (tiny at these shapes): zero-pad and build the lane-dense
    # im2col patch matrix (KKC, N*OHW) directly in the matmul dtype.
    #   row order:    (kh, kw)-major, cin-minor  (matches flattened weights)
    #   column order: batch-major, (oh, ow)-minor
    x_pad = jnp.pad(
        x_nchw, ((0, 0), (0, 0), (padding, padding), (padding, padding)))
    taps = [x_pad[:, :, i:i + out_h, j:j + out_w]        # (N, Cin, OH, OW)
            for i in range(kh) for j in range(kw)]
    patches = jnp.stack(taps, axis=1)                    # (N, KH*KW, Cin, OH, OW)
    patches = patches.reshape(n, kkc, ohw)
    patches = jnp.transpose(patches, (1, 0, 2)).reshape(kkc, n * ohw)
    patches = patches.astype(matmul_dtype)

    # Flattened weights (Cout, KH*KW*Cin), pre-cast to the matmul dtype.
    w2d = jnp.transpose(w_oihw, (0, 2, 3, 1)).reshape(cout, kkc)
    w2d = w2d.astype(matmul_dtype)
    g2 = gamma.reshape(cout, 1).astype(jnp.float32)
    b2 = beta.reshape(cout, 1).astype(jnp.float32)

    # Single fused kernel; the whole problem lives in VMEM (no grid needed).
    out = pl.pallas_call(
        functools.partial(_fused_conv_bn_relu_kernel, n=n, ohw=ohw, eps=eps),
        out_shape=jax.ShapeDtypeStruct((n, cout, ohw), jnp.float32),
        compiler_params=pltpu.CompilerParams(
            vmem_limit_bytes=32 * 1024 * 1024),
    )(patches, w2d, g2, b2)

    # (N, Cout, OH*OW) -> (N, Cout, OH, OW): contiguous reshape, no transpose.
    return out.reshape(n, cout, out_h, out_w)


def _reference(x_nchw, w_oihw, bias, gamma, beta, *, padding, eps=1e-5):
    """Pure-JAX reference of the PyTorch module forward (correctness only)."""
    conv = lax.conv_general_dilated(
        x_nchw, w_oihw, window_strides=(1, 1),
        padding=[(padding, padding), (padding, padding)],
        dimension_numbers=("NCHW", "OIHW", "NCHW"))
    conv = conv + bias[None, :, None, None]
    mean = jnp.mean(conv, axis=(0, 2, 3), keepdims=True)
    var = jnp.mean((conv - mean) ** 2, axis=(0, 2, 3), keepdims=True)
    y = (conv - mean) * lax.rsqrt(var + eps)
    y = y * gamma[None, :, None, None] + beta[None, :, None, None]
    return jnp.maximum(y, 0.0)


if __name__ == "__main__":
    # Shapes consistent with the module: in_plane=4, out_plane=8,
    # kernel_size=3, padding=1, activation=ReLU; input (2, 4, 16, 16) NCHW.
    N, CIN, H, W = 2, 4, 16, 16
    COUT, K, PAD = 8, 3, 1

    key = jax.random.PRNGKey(0)
    kx, kw_, kb = jax.random.split(key, 3)
    x = jax.random.normal(kx, (N, CIN, H, W), dtype=jnp.float32)
    fan_in = CIN * K * K
    bound = 1.0 / float(fan_in) ** 0.5
    w_conv = jax.random.uniform(kw_, (COUT, CIN, K, K), jnp.float32,
                                minval=-bound, maxval=bound)
    b_conv = jax.random.uniform(kb, (COUT,), jnp.float32,
                                minval=-bound, maxval=bound)
    gamma = jnp.ones((COUT,), jnp.float32)   # BatchNorm2d default init
    beta = jnp.zeros((COUT,), jnp.float32)

    ref = _reference(x, w_conv, b_conv, gamma, beta, padding=PAD)

    # Float32 MXU path: tight check (proves kernel logic, incl. bias absorption).
    out_f32 = cnn_block_forward(x, w_conv, b_conv, gamma, beta, padding=PAD,
                                matmul_dtype=jnp.float32)
    out_f32 = jax.block_until_ready(out_f32)
    assert out_f32.shape == (N, COUT, H, W), out_f32.shape
    assert jnp.allclose(out_f32, ref, atol=2e-3, rtol=2e-3), (
        float(jnp.max(jnp.abs(out_f32 - ref))))

    # bf16 MXU operands (recommended config on v5e/v6e/v7x): bf16-appropriate
    # tolerance vs. the f32 reference (f32 accumulation + f32 BN math inside).
    out_bf16 = cnn_block_forward(x, w_conv, b_conv, gamma, beta, padding=PAD,
                                 matmul_dtype=jnp.bfloat16)
    out_bf16 = jax.block_until_ready(out_bf16)
    assert out_bf16.shape == (N, COUT, H, W), out_bf16.shape
    assert jnp.allclose(out_bf16, ref, atol=5e-2, rtol=5e-2), (
        float(jnp.max(jnp.abs(out_bf16 - ref))))

    print("KERNEL_OK")
</pallas_src>

<mosaic_0001>
module attributes {stable_mosaic.version = 11 : i64} {
  func.func @_fused_conv_bn_relu_kernel(%arg0: memref<36x512xf32, #tpu.memory_space<vmem>>, %arg1: memref<8x36xf32, #tpu.memory_space<vmem>>, %arg2: memref<8x1xf32, #tpu.memory_space<vmem>>, %arg3: memref<8x1xf32, #tpu.memory_space<vmem>>, %arg4: memref<2x8x256xf32, #tpu.memory_space<vmem>>) attributes {dimension_semantics = [], scalar_prefetch = 0 : i64, scratch_operands = 0 : i64, tpu.core_type = #tpu.core_type<tc>} {
    %c0 = arith.constant 0 : index
    %c0_0 = arith.constant 0 : index
    %0 = vector.load %arg1[%c0, %c0_0] : memref<8x36xf32, #tpu.memory_space<vmem>>, vector<8x36xf32>
    %c0_1 = arith.constant 0 : index
    %c0_2 = arith.constant 0 : index
    %1 = vector.load %arg0[%c0_1, %c0_2] : memref<36x512xf32, #tpu.memory_space<vmem>>, vector<36x512xf32>
    %cst = arith.constant dense<0.000000e+00> : vector<8x512xf32>
    %2 = tpu.matmul %0, %1, %cst {dimension_numbers = #tpu.dot_dimension_numbers<[1], [0], [0], [1], [0, 0, 1, 1], [], []>} : vector<8x36xf32>, vector<36x512xf32>, vector<8x512xf32> -> vector<8x512xf32>
    %cst_3 = arith.constant dense<0.000000e+00> : vector<8xf32>
    %3 = vector.multi_reduction <add>, %2, %cst_3 [1] : vector<8x512xf32> to vector<8xf32>
    %4 = vector.shape_cast %3 : vector<8xf32> to vector<8x1xf32>
    %cst_4 = arith.constant 0.001953125 : f32
    %5 = vector.broadcast %cst_4 : f32 to vector<8x1xf32>
    %6 = arith.mulf %4, %5 : vector<8x1xf32>
    %7 = arith.mulf %2, %2 : vector<8x512xf32>
    %cst_5 = arith.constant dense<0.000000e+00> : vector<8xf32>
    %8 = vector.multi_reduction <add>, %7, %cst_5 [1] : vector<8x512xf32> to vector<8xf32>
    %9 = vector.shape_cast %8 : vector<8xf32> to vector<8x1xf32>
    %cst_6 = arith.constant 0.001953125 : f32
    %10 = vector.broadcast %cst_6 : f32 to vector<8x1xf32>
    %11 = arith.mulf %9, %10 : vector<8x1xf32>
    %12 = arith.mulf %6, %6 : vector<8x1xf32>
    %13 = arith.subf %11, %12 : vector<8x1xf32>
    %cst_7 = arith.constant 0.000000e+00 : f32
    %14 = vector.broadcast %cst_7 : f32 to vector<8x1xf32>
    %15 = arith.maximumf %13, %14 : vector<8x1xf32>
    %cst_8 = arith.constant 9.99999974E-6 : f32
    %16 = vector.broadcast %cst_8 : f32 to vector<8x1xf32>
    %17 = arith.addf %15, %16 : vector<8x1xf32>
    %18 = math.rsqrt %17 : vector<8x1xf32>
    %c0_9 = arith.constant 0 : index
    %c0_10 = arith.constant 0 : index
    %19 = vector.load %arg2[%c0_9, %c0_10] : memref<8x1xf32, #tpu.memory_space<vmem>>, vector<8x1xf32>
    %20 = arith.mulf %19, %18 : vector<8x1xf32>
    %c0_11 = arith.constant 0 : index
    %c0_12 = arith.constant 0 : index
    %21 = vector.load %arg3[%c0_11, %c0_12] : memref<8x1xf32, #tpu.memory_space<vmem>>, vector<8x1xf32>
    %22 = arith.mulf %6, %20 : vector<8x1xf32>
    %23 = arith.subf %21, %22 : vector<8x1xf32>
    %24 = vector.broadcast %20 : vector<8x1xf32> to vector<8x512xf32>
    %25 = arith.mulf %2, %24 : vector<8x512xf32>
    %26 = vector.broadcast %23 : vector<8x1xf32> to vector<8x512xf32>
    %27 = arith.addf %25, %26 : vector<8x512xf32>
    %cst_13 = arith.constant 0.000000e+00 : f32
    %28 = vector.broadcast %cst_13 : f32 to vector<8x512xf32>
    %29 = arith.maximumf %27, %28 : vector<8x512xf32>
    %30 = vector.extract_strided_slice %29 {offsets = [0, 0], sizes = [8, 256], strides = [1, 1]} : vector<8x512xf32> to vector<8x256xf32>
    %c0_14 = arith.constant 0 : index
    %c0_15 = arith.constant 0 : index
    %c0_16 = arith.constant 0 : index
    %31 = vector.load %arg4[%c0_14, %c0_15, %c0_16] : memref<2x8x256xf32, #tpu.memory_space<vmem>>, vector<1x8x256xf32>
    %32 = vector.shape_cast %31 : vector<1x8x256xf32> to vector<8x256xf32>
    %33 = vector.shape_cast %30 : vector<8x256xf32> to vector<1x8x256xf32>
    tpu.vector_store %arg4[%c0_14, %c0_15, %c0_16], %33 {strides = array<i32>} : memref<2x8x256xf32, #tpu.memory_space<vmem>>, vector<1x8x256xf32>,
    %34 = vector.extract_strided_slice %29 {offsets = [0, 256], sizes = [8, 256], strides = [1, 1]} : vector<8x512xf32> to vector<8x256xf32>
    %c1 = arith.constant 1 : index
    %c0_17 = arith.constant 0 : index
    %c0_18 = arith.constant 0 : index
    %35 = vector.load %arg4[%c1, %c0_17, %c0_18] : memref<2x8x256xf32, #tpu.memory_space<vmem>>, vector<1x8x256xf32>
    %36 = vector.shape_cast %35 : vector<1x8x256xf32> to vector<8x256xf32>
    %37 = vector.shape_cast %34 : vector<8x256xf32> to vector<1x8x256xf32>
    tpu.vector_store %arg4[%c1, %c0_17, %c0_18], %37 {strides = array<i32>} : memref<2x8x256xf32, #tpu.memory_space<vmem>>, vector<1x8x256xf32>,
    return
  }
}

</mosaic_0001>

<llo_original>
// kernel: tpu_custom_call.1
$region0: #{tpu_custom_call.1}
  #allocation0 [shape = 'u32[]', space=smem, size = 0x4, offset = 0x4, fixed_abs, tag = 'smem constant byte address 0x4 - core index']
  #allocation1 [shape = 'u32[144,128]{1,0:T(1,128)}', space=vmem, size = 0x12000, scoped, tag = 'internal scratch']
  %s0 = inlined_call_operand.hbm [shape: f32[36,512], index: 0, kind: input, shape index: {}]
  %s1 = inlined_call_operand.vmem [shape: f32[8,36], index: 1, kind: input, shape index: {}]
  %s2 = inlined_call_operand.vmem [shape: f32[8,1], index: 2, kind: input, shape index: {}]
  %s3 = inlined_call_operand.vmem [shape: f32[8,1], index: 3, kind: input, shape index: {}]
  %s4 = inlined_call_operand.hbm [shape: f32[2,8,256], index: 4, kind: output, shape index: {}]
  %s5 = sld [smem:[#allocation0]]
  $region30: #{tpu_custom_call.1} parent=0
    _
  %s7 = ssub.s32 1, %s5
  %s8 = scalar_select 0, %s7, %s5
  $region1: #{tpu_custom_call.1} parent=0
    #allocation2 [shape = 'u8[81920]{0}', space=vmem, size = 0x14000, scoped, tag = 'input window, operand 0, single buffered']
    #allocation3 [shape = 's32[1]{0}', space=sflag, size = 0x4, scoped, tag = 'scoped memory for tpu_custom_call.1']
    #allocation4 [shape = 's32[1]{0}', space=sflag, size = 0x4, scoped, tag = 'scoped memory for tpu_custom_call.1']
    #allocation5 [shape = 'u8[16384]{0}', space=vmem, size = 0x4000, scoped, tag = 'output window, operand 0, single buffered']
    %9 = vsyncpa [#allocation3], 0
    %10 = vsyncpa [#allocation4], 0
    // Predicated region
    $region2: #{tpu_custom_call.1} parent=1 // pred_check
      _
    $region3: #{tpu_custom_call.1} parent=1 // pred_check_branch
      %12 = sbr.rel (0) target = $region5
    $region4: #{tpu_custom_call.1} parent=1 // pred_region
      %s14 = ssub.s32 2560, 2560
      %15 = vsyncadd [#allocation3], %s14
      %s16 = sshll.u32 [#allocation2], 4
      %s17 = int_to_ptr.vmem [resolvable:$true] %s16
      %22 = dma.hbm_to_vmem [thread:$0]  %s0, 2560, %s17, [#allocation3], 512, 512, 32
    $region5: #{tpu_custom_call.1} parent=1 // pred_fallthru
      _
    // Predicated region
    $region6: #{tpu_custom_call.1} parent=1 // pred_check
      _
    $region7: #{tpu_custom_call.1} parent=1 // pred_check_branch
      %24 = sbr.rel (0) target = $region9
    $region8: #{tpu_custom_call.1} parent=1 // pred_region
      _
    $region9: #{tpu_custom_call.1} parent=1 // pred_fallthru
      _
    // Predicated region
    $region10: #{tpu_custom_call.1} parent=1 // pred_check
      _
    $region11: #{tpu_custom_call.1} parent=1 // pred_check_branch
      %26 = sbr.rel (0) target = $region13
    $region12: #{tpu_custom_call.1} parent=1 // pred_region
      _
    $region13: #{tpu_custom_call.1} parent=1 // pred_fallthru
      _
    // Predicated region
    $region14: #{tpu_custom_call.1} parent=1 // pred_check
      _
    $region15: #{tpu_custom_call.1} parent=1 // pred_check_branch
      %28 = sbr.rel (0) target = $region17
    $region16: #{tpu_custom_call.1} parent=1 // pred_region
      _
    $region17: #{tpu_custom_call.1} parent=1 // pred_fallthru
      _
    // Predicated region
    $region18: #{tpu_custom_call.1} parent=1 // pred_check
      _
    $region19: #{tpu_custom_call.1} parent=1 // pred_check_branch
      %30 = sbr.rel (0) target = $region21
    $region20: #{tpu_custom_call.1} parent=1 // pred_region
      %31 = dma.done [#allocation3], 2560
    $region21: #{tpu_custom_call.1} parent=1 // pred_fallthru
      _
    %v32 = vld [vmem:[%s1] sm:$0xff]
    %v33 = vld [vmem:[#allocation2] sm:$0xff]
    %v34 = vld [vmem:[#allocation2 + $0x8] sm:$0xff]
    %v35 = vld [vmem:[#allocation2 + $0x10] sm:$0xff]
    %v36 = vld [vmem:[#allocation2 + $0x18] sm:$0xff]
    %v37 = vld [vmem:[#allocation2 + $0x20] sm:$0xff]
    %v38 = vld [vmem:[#allocation2 + $0x28] sm:$0xff]
    %v39 = vld [vmem:[#allocation2 + $0x30] sm:$0xff]
    %v40 = vld [vmem:[#allocation2 + $0x38] sm:$0xff]
    %v41 = vld [vmem:[#allocation2 + $0x40] sm:$0xff]
    %v42 = vld [vmem:[#allocation2 + $0x48] sm:$0xff]
    %v43 = vld [vmem:[#allocation2 + $0x50] sm:$0xff]
    %v44 = vld [vmem:[#allocation2 + $0x58] sm:$0xff]
    %v45 = vld [vmem:[#allocation2 + $0x60] sm:$0xff]
    %v46 = vld [vmem:[#allocation2 + $0x68] sm:$0xff]
    %v47 = vld [vmem:[#allocation2 + $0x70] sm:$0xff]
    %v48 = vld [vmem:[#allocation2 + $0x78] sm:$0xff]
    %v49 = vld [vmem:[#allocation2 + $0x80] sm:$0xf]
    %v50 = vld [vmem:[#allocation2 + $0x88] sm:$0xf]
    %v51 = vld [vmem:[#allocation2 + $0x90] sm:$0xf]
    %v52 = vld [vmem:[#allocation2 + $0x98] sm:$0xf]
    %vm53 = vcmask 293888
    %v55 = vsel %vm53, %v32, 0
    %vm57 = vcmask 1043456
    %v59 = vsel %vm57, %v49, 0
    %v62 = vsel %vm57, %v50, 0
    %v65 = vsel %vm57, %v51, 0
    %v68 = vsel %vm57, %v52, 0
    %70 = vmatprep.subr.mxu0 %v34
    %71 = vmatpush1.msra.mxu0 %v33
    %72 = vmatprep.subr.mxu0 %v38
    %73 = vmatpush1.msra.mxu0 %v37
    %74 = vmatprep.subr.mxu0 %v42
    %75 = vmatpush1.msra.mxu0 %v41
    %76 = vmatprep.subr.mxu0 %v46
    %77 = vmatpush1.msra.mxu0 %v45
    %78 = vmatprep.subr.mxu0 %v62
    %79 = vmatpush1.msra.mxu0 %v59
    %80 = vmatprep.subr.mxu0 0.0
    %81 = vmatpush1.msra.mxu0 0.0
    %82 = vmatprep.subr.mxu0 0.0
    %83 = vmatpush1.msra.mxu0 0.0
    %84 = vmatprep.subr.mxu0 0.0
    %85 = vmatpush1.msra.mxu0 0.0
    %86 = vmatprep.subr.mxu0 0.0
    %87 = vmatpush1.msra.mxu0 0.0
    %88 = vmatprep.subr.mxu0 0.0
    %89 = vmatpush1.msra.mxu0 0.0
    %90 = vmatprep.subr.mxu0 0.0
    %91 = vmatpush1.msra.mxu0 0.0
    %92 = vmatprep.subr.mxu0 0.0
    %93 = vmatpush1.msra.mxu0 0.0
    %94 = vmatprep.subr.mxu0 0.0
    %95 = vmatpush1.msra.mxu0 0.0
    %96 = vmatprep.subr.mxu0 0.0
    %97 = vmatpush1.msra.mxu0 0.0
    %98 = vmatprep.subr.mxu0 0.0
    %99 = vmatpush1.msra.mxu0 0.0
    %100 = vmatprep.subr.mxu0 0.0
    %101 = vmatpush1.msra.mxu0 0.0
    %102 = vmatprep.subr.mxu0 0.0
    %103 = vmatpush1.msra.mxu0 0.0
    %104 = vmatprep.subr.mxu0 0.0
    %105 = vmatpush1.msra.mxu0 0.0
    %106 = vmatprep.subr.mxu0 0.0
    %107 = vmatpush1.msra.mxu0 0.0
    %108 = vmatprep.subr.mxu0 0.0
    %109 = vmatpush1.msra.mxu0 0.0
    %110 = vmatprep.subr.mxu0 0.0
    %111 = vmatpush1.msra.mxu0 0.0
    %112 = vmatprep.subr.mxu0 0.0
    %113 = vmatpush1.msra.mxu0 0.0
    %114 = vmatprep.subr.mxu0 0.0
    %115 = vmatpush1.msra.mxu0 0.0
    %116 = vmatprep.subr.mxu0 0.0
    %117 = vmatpush1.msra.mxu0 0.0
    %118 = vmatprep.subr.mxu0 0.0
    %119 = vmatpush1.msra.mxu0 0.0
    %120 = vmatprep.subr.mxu0 0.0
    %121 = vmatpush1.msra.mxu0 0.0
    %122 = vmatprep.subr.mxu0 0.0
    %123 = vmatpush1.msra.mxu0 0.0
    %124 = vmatprep.subr.mxu0 0.0
    %125 = vmatpush1.msra.mxu0 0.0
    %126 = vmatprep.subr.mxu0 0.0
    %127 = vmatpush1.msra.mxu0 0.0
    %128 = vmatprep.subr.mxu0 0.0
    %129 = vmatpush1.msra.mxu0 0.0
    %130 = vmatprep.subr.mxu0 0.0
    %131 = vmatpush1.msra.mxu0 0.0
    %132 = vmatprep.subr.mxu0 0.0
    %133 = vmatpush1.msra.mxu0 0.0
    %134 = vmatprep.mubr.f32.mxu0 0.0
    %135 = vmatmul.mubr.f32.gmra.mrb[0].mxu0 %v55
    %v136 = vpop.f32.mrb[0].mxu0
    %v137 = vadd.f32 0.0, %v136
    %v138 = vpop.f32.mrb[0].mxu0
    %v139 = vadd.f32 0.0, %v138
    %140 = vdwg.mxu0
    %141 = vmatprep.subr.mxu0 %v36
    %142 = vmatpush1.msra.mxu0 %v35
    %143 = vmatprep.subr.mxu0 %v40
    %144 = vmatpush1.msra.mxu0 %v39
    %145 = vmatprep.subr.mxu0 %v44
    %146 = vmatpush1.msra.mxu0 %v43
    %147 = vmatprep.subr.mxu0 %v48
    %148 = vmatpush1.msra.mxu0 %v47
    %149 = vmatprep.subr.mxu0 %v68
    %150 = vmatpush1.msra.mxu0 %v65
    %151 = vmatprep.subr.mxu0 0.0
    %152 = vmatpush1.msra.mxu0 0.0
    %153 = vmatprep.subr.mxu0 0.0
    %154 = vmatpush1.msra.mxu0 0.0
    %155 = vmatprep.subr.mxu0 0.0
    %156 = vmatpush1.msra.mxu0 0.0
    %157 = vmatprep.subr.mxu0 0.0
    %158 = vmatpush1.msra.mxu0 0.0
    %159 = vmatprep.subr.mxu0 0.0
    %160 = vmatpush1.msra.mxu0 0.0
    %161 = vmatprep.subr.mxu0 0.0
    %162 = vmatpush1.msra.mxu0 0.0
    %163 = vmatprep.subr.mxu0 0.0
    %164 = vmatpush1.msra.mxu0 0.0
    %165 = vmatprep.subr.mxu0 0.0
    %166 = vmatpush1.msra.mxu0 0.0
    %167 = vmatprep.subr.mxu0 0.0
    %168 = vmatpush1.msra.mxu0 0.0
    %169 = vmatprep.subr.mxu0 0.0
    %170 = vmatpush1.msra.mxu0 0.0
    %171 = vmatprep.subr.mxu0 0.0
    %172 = vmatpush1.msra.mxu0 0.0
    %173 = vmatprep.subr.mxu0 0.0
    %174 = vmatpush1.msra.mxu0 0.0
    %175 = vmatprep.subr.mxu0 0.0
    %176 = vmatpush1.msra.mxu0 0.0
    %177 = vmatprep.subr.mxu0 0.0
    %178 = vmatpush1.msra.mxu0 0.0
    %179 = vmatprep.subr.mxu0 0.0
    %180 = vmatpush1.msra.mxu0 0.0
    %181 = vmatprep.subr.mxu0 0.0
    %182 = vmatpush1.msra.mxu0 0.0
    %183 = vmatprep.subr.mxu0 0.0
    %184 = vmatpush1.msra.mxu0 0.0
    %185 = vmatprep.subr.mxu0 0.0
    %186 = vmatpush1.msra.mxu0 0.0
    %187 = vmatprep.subr.mxu0 0.0
    %188 = vmatpush1.msra.mxu0 0.0
    %189 = vmatprep.subr.mxu0 0.0
    %190 = vmatpush1.msra.mxu0 0.0
    %191 = vmatprep.subr.mxu0 0.0
    %192 = vmatpush1.msra.mxu0 0.0
    %193 = vmatprep.subr.mxu0 0.0
    %194 = vmatpush1.msra.mxu0 0.0
    %195 = vmatprep.subr.mxu0 0.0
    %196 = vmatpush1.msra.mxu0 0.0
    %197 = vmatprep.subr.mxu0 0.0
    %198 = vmatpush1.msra.mxu0 0.0
    %199 = vmatprep.subr.mxu0 0.0
    %200 = vmatpush1.msra.mxu0 0.0
    %201 = vmatprep.subr.mxu0 0.0
    %202 = vmatpush1.msra.mxu0 0.0
    %203 = vmatprep.subr.mxu0 0.0
    %204 = vmatpush1.msra.mxu0 0.0
    %205 = vmatprep.mubr.f32.mxu0 0.0
    %206 = vmatmul.mubr.f32.gmra.mrb[0].mxu0 %v55
    %v207 = vpop.f32.mrb[0].mxu0
    %v208 = vadd.f32 0.0, %v207
    %v209 = vpop.f32.mrb[0].mxu0
    %v210 = vadd.f32 0.0, %v209
    %211 = vdwg.mxu0
    %v212 = vadd.f32 %v137, %v139
    %v213 = vadd.f32 %v212, %v208
    %v214 = vadd.f32 %v213, %v210
    %215 = vadd.xlane.f32.xlu0 %v214
    %v216 = vpop.xlane.xlu0 %215
    %v217 = vmul.f32 %v216, 0.001953125
    %v218 = vmul.f32 %v137, %v137
    %v219 = vmul.f32 %v139, %v139
    %v220 = vmul.f32 %v208, %v208
    %v221 = vmul.f32 %v210, %v210
    %v222 = vadd.f32 %v218, %v219
    %v223 = vadd.f32 %v222, %v220
    %v224 = vadd.f32 %v223, %v221
    %225 = vadd.xlane.f32.xlu0 %v224
    %v226 = vpop.xlane.xlu0 %225
    %v227 = vmul.f32 %v226, 0.001953125
    %v228 = vmul.f32 %v217, %v217
    %v229 = vsub.f32 %v227, %v228
    %v230 = vmax.f32 %v229, 0.0
    %v231 = vadd.f32 %v230, 1e-05
    %v232 = vrsqrt.pop %v231
    %v233 = vld [vmem:[%s2] sm:$0xff]
    %v234 = vmul.f32 %v233, %v232
    %v235 = vld [vmem:[%s3] sm:$0xff]
    %v236 = vmul.f32 %v217, %v234
    %v237 = vsub.f32 %v235, %v236
    %239 = vset.pattern.permute.xlu0 0
    %240 = vperm.xlu0 %239, %v234
    %v241 = vpop.permute.xlu0 %240
    %v243 = vmul.f32 %v137, %v241
    %v244 = vmul.f32 %v139, %v241
    %v245 = vmul.f32 %v208, %v241
    %v246 = vmul.f32 %v210, %v241
    %248 = vset.pattern.permute.xlu0 0
    %249 = vperm.xlu0 %248, %v237
    %v250 = vpop.permute.xlu0 %249
    %v252 = vadd.f32 %v243, %v250
    %v253 = vadd.f32 %v244, %v250
    %v254 = vadd.f32 %v245, %v250
    %v255 = vadd.f32 %v246, %v250
    %v256 = vmax.f32 %v252, 0.0
    %v257 = vmax.f32 %v253, 0.0
    %v258 = vmax.f32 %v254, 0.0
    %v259 = vmax.f32 %v255, 0.0
    %260 = vst [vmem:[#allocation5] sm:$0xff] %v256
    %261 = vst [vmem:[#allocation5 + $0x8] sm:$0xff] %v257
    %s262 = scalar_lea.vmem [#allocation5], 16
    %263 = vst [vmem:[%s262] sm:$0xff] %v258
    %264 = vst [vmem:[%s262 + $0x8] sm:$0xff] %v259
    // Predicated region
    $region22: #{tpu_custom_call.1} parent=1 // pred_check
      _
    $region23: #{tpu_custom_call.1} parent=1 // pred_check_branch
      %266 = sbr.rel (0) target = $region25
    $region24: #{tpu_custom_call.1} parent=1 // pred_region
      %s268 = ssub.s32 512, 512
      %269 = vsyncadd [#allocation4], %s268
      %s270 = sshll.u32 [#allocation5], 4
      %s271 = int_to_ptr.vmem [resolvable:$true] %s270
      %276 = dma.vmem_to_hbm [thread:$0]  %s271, 512, %s4, [#allocation4], 256, 256, 16
    $region25: #{tpu_custom_call.1} parent=1 // pred_fallthru
      _
    // Predicated region
    $region26: #{tpu_custom_call.1} parent=1 // pred_check
      _
    $region27: #{tpu_custom_call.1} parent=1 // pred_check_branch
      %278 = sbr.rel (0) target = $region29
    $region28: #{tpu_custom_call.1} parent=1 // pred_region
      %279 = dma.done [#allocation4], 512
    $region29: #{tpu_custom_call.1} parent=1 // pred_fallthru
      _
    %280 = vsyncpa [#allocation3], 1
    %281 = vsyncpa [#allocation4], 1

</llo_original>
